<compile_context>
chip_gen: v7x
topology: tpu7x:2x2x1
jax: 0.10.0
libtpu: 0.0.40
codegen_flags: <defaults>
</compile_context>

<pallas_src>
import jax
import jax.numpy as jnp
from jax.experimental import pallas as pl
from jax.experimental.pallas import tpu as pltpu

IN_DIM = 256
OUT_DIM = 10
OUT_PAD = 128  # lane-dense output width (unmasked stores); sliced to 10 outside


def _round_up(n, m):
    return (n + m - 1) // m * m


def _make_mlp_kernel(use_dropout, keep_threshold):
    """Builds the fused MLP kernel body.

    Dropout: keep element iff int32(random_bits) >= keep_threshold, which gives
    P(keep) = 1 - rate; the 1/(1-rate) scale is pre-folded into w2/w3.
    """

    def kernel(*refs):
        if use_dropout:
            x_ref, bits1_ref, bits2_ref = refs[:3]
            rest = refs[3:]
        else:
            x_ref = refs[0]
            rest = refs[1:]
        (w1_ref, b1_ref, w2_ref, b2_ref,
         w3_ref, b3_ref, w4_ref, b4_ref, o_ref) = rest

        x = x_ref[...]                                        # bf16 [tb, 256]

        # fc1 + ReLU (+ dropout1)
        h = jnp.dot(x, w1_ref[...], preferred_element_type=jnp.float32)
        h = jnp.maximum(h + b1_ref[...], 0.0)
        if use_dropout:
            h = jnp.where(bits1_ref[...] >= keep_threshold, h, 0.0)

        # fc2 + ReLU (+ dropout2)   (w2 pre-scaled by 1/(1-p) when training)
        h = jnp.dot(h.astype(jnp.bfloat16), w2_ref[...],
                    preferred_element_type=jnp.float32)
        h = jnp.maximum(h + b2_ref[...], 0.0)
        if use_dropout:
            h = jnp.where(bits2_ref[...] >= keep_threshold, h, 0.0)

        # fc3 + ReLU                (w3 pre-scaled by 1/(1-p) when training)
        h = jnp.dot(h.astype(jnp.bfloat16), w3_ref[...],
                    preferred_element_type=jnp.float32)
        h = jnp.maximum(h + b3_ref[...], 0.0)

        # fc4 (output columns padded to 128 -> lane-dense store)
        out = jnp.dot(h.astype(jnp.bfloat16), w4_ref[...],
                      preferred_element_type=jnp.float32) + b4_ref[...]
        o_ref[...] = out.astype(o_ref.dtype)

    return kernel


def fully_connected_nn_with_dropout(x, params, *, dropout_key=None,
                                    dropout_rate=0.5, training=True,
                                    tile_b=512):
    """x: [B, 256] float32 -> [B, 10] float32."""
    B, D = x.shape
    assert D == IN_DIM, f"expected {IN_DIM} input features, got {D}"
    use_dropout = bool(training) and float(dropout_rate) > 0.0
    (w1, b1), (w2, b2), (w3, b3), (w4, b4) = params

    # Batch tile: multiple of 128 (MXU-friendly M), capped to the padded batch.
    tile_b = max(128, min(_round_up(int(tile_b), 128), _round_up(B, 128)))
    Bp = _round_up(B, tile_b)
    if Bp != B:
        x = jnp.pad(x, ((0, Bp - B), (0, 0)))
    grid = (Bp // tile_b,)

    # --- host-side weight prep ---------------------------------------------
    if use_dropout:
        inv_keep = 1.0 / (1.0 - float(dropout_rate))
        w2 = w2 * inv_keep            # fold dropout1 scale into fc2 weights
        w3 = w3 * inv_keep            # fold dropout2 scale into fc3 weights
    w4p = jnp.zeros((w4.shape[0], OUT_PAD), w4.dtype).at[:, :OUT_DIM].set(w4)
    b4p = jnp.zeros((1, OUT_PAD), b4.dtype).at[:, :OUT_DIM].set(b4)
    ws = [w.astype(jnp.bfloat16) for w in (w1, w2, w3, w4p)]   # bf16 MXU operands
    bs = [b1, b2, b3, b4p]                                     # biases stay fp32
    x_bf = x.astype(jnp.bfloat16)

    args = [x_bf]
    in_specs = [pl.BlockSpec((tile_b, IN_DIM), lambda i: (i, 0))]

    keep_threshold = 0
    if use_dropout:
        # int32 threshold t with P(int32_bits >= t) = 1 - rate.
        t = int(round((2.0 * float(dropout_rate) - 1.0) * 2.0 ** 31))
        keep_threshold = max(-(2 ** 31), min(2 ** 31 - 1, t))
        if dropout_key is None:
            dropout_key = jax.random.PRNGKey(0)
        k1, k2 = jax.random.split(dropout_key)
        bits1 = jax.lax.bitcast_convert_type(
            jax.random.bits(k1, (Bp, 128), jnp.uint32), jnp.int32)
        bits2 = jax.lax.bitcast_convert_type(
            jax.random.bits(k2, (Bp, 64), jnp.uint32), jnp.int32)
        args += [bits1, bits2]
        in_specs += [pl.BlockSpec((tile_b, 128), lambda i: (i, 0)),
                     pl.BlockSpec((tile_b, 64), lambda i: (i, 0))]

    for w, b in zip(ws, bs):
        args += [w, b]
        # Constant index_map -> weights/biases stay VMEM-resident across tiles.
        in_specs += [pl.BlockSpec(w.shape, lambda i: (0, 0)),
                     pl.BlockSpec(b.shape, lambda i: (0, 0))]

    kernel = _make_mlp_kernel(use_dropout, keep_threshold)

    out = pl.pallas_call(
        kernel,
        grid=grid,
        in_specs=in_specs,
        out_specs=pl.BlockSpec((tile_b, OUT_PAD), lambda i: (i, 0)),
        out_shape=jax.ShapeDtypeStruct((Bp, OUT_PAD), jnp.float32),
        compiler_params=pltpu.CompilerParams(
            dimension_semantics=("parallel",),       # shard batch tiles across TCs
            vmem_limit_bytes=32 * 1024 * 1024,
        ),
    )(*args)
    return out[:B, :OUT_DIM]


def init_params(key):
    """Deterministic synthetic parameters with the module's shapes.
    Weights are [in, out]; biases are [1, out]."""
    dims = [(256, 128), (128, 64), (64, 32), (32, 10)]
    params = []
    for i, (din, dout) in enumerate(dims):
        kw, kb = jax.random.split(jax.random.fold_in(key, i))
        w = jax.random.normal(kw, (din, dout), jnp.float32) * (1.0 / jnp.sqrt(din))
        b = jax.random.normal(kb, (1, dout), jnp.float32) * 0.01
        params.append((w, b))
    return params


def _ref_eval_bf16(x, params):
    """Pure-JAX eval-mode reference with the same bf16-operand / fp32-accum
    precision as the kernel (dropout is identity in eval mode)."""
    (w1, b1), (w2, b2), (w3, b3), (w4, b4) = params
    h = x
    for (w, b), act in zip(((w1, b1), (w2, b2), (w3, b3), (w4, b4)),
                           (True, True, True, False)):
        h = jnp.dot(h.astype(jnp.bfloat16), w.astype(jnp.bfloat16),
                    preferred_element_type=jnp.float32) + b
        if act:
            h = jnp.maximum(h, 0.0)
    return h


if __name__ == "__main__":
    key = jax.random.PRNGKey(0)
    kx, kp, kd = jax.random.split(key, 3)

    B = 8
    x = jax.random.normal(kx, (B, IN_DIM), jnp.float32)
    params = init_params(kp)

    # Training mode: exercises the in-kernel (integer-threshold) dropout path.
    out_train = fully_connected_nn_with_dropout(
        x, params, dropout_key=kd, dropout_rate=0.5, training=True)
    out_train = jax.block_until_ready(out_train)
    assert out_train.shape == (B, OUT_DIM) and out_train.dtype == jnp.float32
    assert bool(jnp.all(jnp.isfinite(out_train)))

    # Eval mode: deterministic forward, checked against a pure-JAX reference.
    out_eval = jax.block_until_ready(
        fully_connected_nn_with_dropout(x, params, training=False))
    ref = _ref_eval_bf16(x, params)
    assert out_eval.shape == (B, OUT_DIM)
    assert jnp.allclose(out_eval, ref, atol=2e-2, rtol=2e-2), (
        float(jnp.max(jnp.abs(out_eval - ref))))

    print("KERNEL_OK")
</pallas_src>

<mosaic_0001>
module attributes {stable_mosaic.version = 11 : i64} {
  func.func @kernel(%arg0: i32, %arg1: memref<128x256xbf16, #tpu.memory_space<vmem>>, %arg2: memref<128x128xi32, #tpu.memory_space<vmem>>, %arg3: memref<128x64xi32, #tpu.memory_space<vmem>>, %arg4: memref<256x128xbf16, #tpu.memory_space<vmem>>, %arg5: memref<1x128xf32, #tpu.memory_space<vmem>>, %arg6: memref<128x64xbf16, #tpu.memory_space<vmem>>, %arg7: memref<1x64xf32, #tpu.memory_space<vmem>>, %arg8: memref<64x32xbf16, #tpu.memory_space<vmem>>, %arg9: memref<1x32xf32, #tpu.memory_space<vmem>>, %arg10: memref<32x128xbf16, #tpu.memory_space<vmem>>, %arg11: memref<1x128xf32, #tpu.memory_space<vmem>>, %arg12: memref<128x128xf32, #tpu.memory_space<vmem>>) attributes {dimension_semantics = [#tpu.dimension_semantics<parallel>], iteration_bounds = array<i64: 1>, scalar_prefetch = 0 : i64, scratch_operands = 0 : i64, tpu.core_type = #tpu.core_type<tc>, window_params = [{transform_indices = @transform_0, window_bounds = array<i64: 128, 256>}, {transform_indices = @transform_1, window_bounds = array<i64: 128, 128>}, {transform_indices = @transform_2, window_bounds = array<i64: 128, 64>}, {pipeline_mode = #tpu.pipeline_mode<synchronous>, transform_indices = @transform_3, window_bounds = array<i64: 256, 128>}, {pipeline_mode = #tpu.pipeline_mode<synchronous>, transform_indices = @transform_4, window_bounds = array<i64: 1, 128>}, {pipeline_mode = #tpu.pipeline_mode<synchronous>, transform_indices = @transform_5, window_bounds = array<i64: 128, 64>}, {pipeline_mode = #tpu.pipeline_mode<synchronous>, transform_indices = @transform_6, window_bounds = array<i64: 1, 64>}, {pipeline_mode = #tpu.pipeline_mode<synchronous>, transform_indices = @transform_7, window_bounds = array<i64: 64, 32>}, {pipeline_mode = #tpu.pipeline_mode<synchronous>, transform_indices = @transform_8, window_bounds = array<i64: 1, 32>}, {pipeline_mode = #tpu.pipeline_mode<synchronous>, transform_indices = @transform_9, window_bounds = array<i64: 32, 128>}, {pipeline_mode = #tpu.pipeline_mode<synchronous>, transform_indices = @transform_10, window_bounds = array<i64: 1, 128>}, {transform_indices = @transform_11, window_bounds = array<i64: 128, 128>}]} {
    %c0 = arith.constant 0 : index
    %c0_0 = arith.constant 0 : index
    %0 = vector.load %arg1[%c0, %c0_0] : memref<128x256xbf16, #tpu.memory_space<vmem>>, vector<128x256xbf16>
    %c0_1 = arith.constant 0 : index
    %c0_2 = arith.constant 0 : index
    %1 = vector.load %arg4[%c0_1, %c0_2] : memref<256x128xbf16, #tpu.memory_space<vmem>>, vector<256x128xbf16>
    %cst = arith.constant dense<0.000000e+00> : vector<128x128xf32>
    %2 = tpu.matmul %0, %1, %cst {dimension_numbers = #tpu.dot_dimension_numbers<[1], [0], [0], [1], [0, 0, 1, 1], [], []>} : vector<128x256xbf16>, vector<256x128xbf16>, vector<128x128xf32> -> vector<128x128xf32>
    %c0_3 = arith.constant 0 : index
    %c0_4 = arith.constant 0 : index
    %3 = vector.load %arg5[%c0_3, %c0_4] : memref<1x128xf32, #tpu.memory_space<vmem>>, vector<1x128xf32>
    %4 = vector.broadcast %3 : vector<1x128xf32> to vector<128x128xf32>
    %5 = arith.addf %2, %4 : vector<128x128xf32>
    %cst_5 = arith.constant 0.000000e+00 : f32
    %6 = vector.broadcast %cst_5 : f32 to vector<128x128xf32>
    %7 = arith.maximumf %5, %6 : vector<128x128xf32>
    %c0_6 = arith.constant 0 : index
    %c0_7 = arith.constant 0 : index
    %8 = vector.load %arg2[%c0_6, %c0_7] : memref<128x128xi32, #tpu.memory_space<vmem>>, vector<128x128xi32>
    %c0_i32 = arith.constant 0 : i32
    %9 = vector.broadcast %c0_i32 : i32 to vector<128x128xi32>
    %10 = arith.cmpi sge, %8, %9 : vector<128x128xi32>
    %cst_8 = arith.constant 0.000000e+00 : f32
    %11 = vector.broadcast %cst_8 : f32 to vector<128x128xf32>
    %12 = arith.select %10, %7, %11 : vector<128x128xi1>, vector<128x128xf32>
    %13 = arith.truncf %12 : vector<128x128xf32> to vector<128x128xbf16>
    %c0_9 = arith.constant 0 : index
    %c0_10 = arith.constant 0 : index
    %14 = vector.load %arg6[%c0_9, %c0_10] : memref<128x64xbf16, #tpu.memory_space<vmem>>, vector<128x64xbf16>
    %cst_11 = arith.constant dense<0.000000e+00> : vector<128x64xf32>
    %15 = tpu.matmul %13, %14, %cst_11 {dimension_numbers = #tpu.dot_dimension_numbers<[1], [0], [0], [1], [0, 0, 1, 1], [], []>} : vector<128x128xbf16>, vector<128x64xbf16>, vector<128x64xf32> -> vector<128x64xf32>
    %c0_12 = arith.constant 0 : index
    %c0_13 = arith.constant 0 : index
    %16 = vector.load %arg7[%c0_12, %c0_13] : memref<1x64xf32, #tpu.memory_space<vmem>>, vector<1x64xf32>
    %17 = vector.broadcast %16 : vector<1x64xf32> to vector<128x64xf32>
    %18 = arith.addf %15, %17 : vector<128x64xf32>
    %cst_14 = arith.constant 0.000000e+00 : f32
    %19 = vector.broadcast %cst_14 : f32 to vector<128x64xf32>
    %20 = arith.maximumf %18, %19 : vector<128x64xf32>
    %c0_15 = arith.constant 0 : index
    %c0_16 = arith.constant 0 : index
    %21 = vector.load %arg3[%c0_15, %c0_16] : memref<128x64xi32, #tpu.memory_space<vmem>>, vector<128x64xi32>
    %c0_i32_17 = arith.constant 0 : i32
    %22 = vector.broadcast %c0_i32_17 : i32 to vector<128x64xi32>
    %23 = arith.cmpi sge, %21, %22 : vector<128x64xi32>
    %cst_18 = arith.constant 0.000000e+00 : f32
    %24 = vector.broadcast %cst_18 : f32 to vector<128x64xf32>
    %25 = arith.select %23, %20, %24 : vector<128x64xi1>, vector<128x64xf32>
    %26 = arith.truncf %25 : vector<128x64xf32> to vector<128x64xbf16>
    %c0_19 = arith.constant 0 : index
    %c0_20 = arith.constant 0 : index
    %27 = vector.load %arg8[%c0_19, %c0_20] : memref<64x32xbf16, #tpu.memory_space<vmem>>, vector<64x32xbf16>
    %cst_21 = arith.constant dense<0.000000e+00> : vector<128x32xf32>
    %28 = tpu.matmul %26, %27, %cst_21 {dimension_numbers = #tpu.dot_dimension_numbers<[1], [0], [0], [1], [0, 0, 1, 1], [], []>} : vector<128x64xbf16>, vector<64x32xbf16>, vector<128x32xf32> -> vector<128x32xf32>
    %c0_22 = arith.constant 0 : index
    %c0_23 = arith.constant 0 : index
    %29 = vector.load %arg9[%c0_22, %c0_23] : memref<1x32xf32, #tpu.memory_space<vmem>>, vector<1x32xf32>
    %30 = vector.broadcast %29 : vector<1x32xf32> to vector<128x32xf32>
    %31 = arith.addf %28, %30 : vector<128x32xf32>
    %cst_24 = arith.constant 0.000000e+00 : f32
    %32 = vector.broadcast %cst_24 : f32 to vector<128x32xf32>
    %33 = arith.maximumf %31, %32 : vector<128x32xf32>
    %34 = arith.truncf %33 : vector<128x32xf32> to vector<128x32xbf16>
    %c0_25 = arith.constant 0 : index
    %c0_26 = arith.constant 0 : index
    %35 = vector.load %arg10[%c0_25, %c0_26] : memref<32x128xbf16, #tpu.memory_space<vmem>>, vector<32x128xbf16>
    %cst_27 = arith.constant dense<0.000000e+00> : vector<128x128xf32>
    %36 = tpu.matmul %34, %35, %cst_27 {dimension_numbers = #tpu.dot_dimension_numbers<[1], [0], [0], [1], [0, 0, 1, 1], [], []>} : vector<128x32xbf16>, vector<32x128xbf16>, vector<128x128xf32> -> vector<128x128xf32>
    %c0_28 = arith.constant 0 : index
    %c0_29 = arith.constant 0 : index
    %37 = vector.load %arg11[%c0_28, %c0_29] : memref<1x128xf32, #tpu.memory_space<vmem>>, vector<1x128xf32>
    %38 = vector.broadcast %37 : vector<1x128xf32> to vector<128x128xf32>
    %39 = arith.addf %36, %38 : vector<128x128xf32>
    %c0_30 = arith.constant 0 : index
    %c0_31 = arith.constant 0 : index
    %40 = vector.load %arg12[%c0_30, %c0_31] : memref<128x128xf32, #tpu.memory_space<vmem>>, vector<128x128xf32>
    tpu.vector_store %arg12[%c0_30, %c0_31], %39 {strides = array<i32>} : memref<128x128xf32, #tpu.memory_space<vmem>>, vector<128x128xf32>,
    return
  }
  func.func @transform_0(%arg0: i32) -> (i32, i32) {
    %c0_i32 = arith.constant 0 : i32
    %c0_i32_0 = arith.constant 0 : i32
    return %arg0, %c0_i32 : i32, i32
  }
  func.func @transform_1(%arg0: i32) -> (i32, i32) {
    %c0_i32 = arith.constant 0 : i32
    %c0_i32_0 = arith.constant 0 : i32
    return %arg0, %c0_i32 : i32, i32
  }
  func.func @transform_2(%arg0: i32) -> (i32, i32) {
    %c0_i32 = arith.constant 0 : i32
    %c0_i32_0 = arith.constant 0 : i32
    return %arg0, %c0_i32 : i32, i32
  }
  func.func @transform_3(%arg0: i32) -> (i32, i32) {
    %c0_i32 = arith.constant 0 : i32
    %c0_i32_0 = arith.constant 0 : i32
    %c0_i32_1 = arith.constant 0 : i32
    return %c0_i32, %c0_i32_0 : i32, i32
  }
  func.func @transform_4(%arg0: i32) -> (i32, i32) {
    %c0_i32 = arith.constant 0 : i32
    %c0_i32_0 = arith.constant 0 : i32
    %c0_i32_1 = arith.constant 0 : i32
    return %c0_i32, %c0_i32_0 : i32, i32
  }
  func.func @transform_5(%arg0: i32) -> (i32, i32) {
    %c0_i32 = arith.constant 0 : i32
    %c0_i32_0 = arith.constant 0 : i32
    %c0_i32_1 = arith.constant 0 : i32
    return %c0_i32, %c0_i32_0 : i32, i32
  }
  func.func @transform_6(%arg0: i32) -> (i32, i32) {
    %c0_i32 = arith.constant 0 : i32
    %c0_i32_0 = arith.constant 0 : i32
    %c0_i32_1 = arith.constant 0 : i32
    return %c0_i32, %c0_i32_0 : i32, i32
  }
  func.func @transform_7(%arg0: i32) -> (i32, i32) {
    %c0_i32 = arith.constant 0 : i32
    %c0_i32_0 = arith.constant 0 : i32
    %c0_i32_1 = arith.constant 0 : i32
    return %c0_i32, %c0_i32_0 : i32, i32
  }
  func.func @transform_8(%arg0: i32) -> (i32, i32) {
    %c0_i32 = arith.constant 0 : i32
    %c0_i32_0 = arith.constant 0 : i32
    %c0_i32_1 = arith.constant 0 : i32
    return %c0_i32, %c0_i32_0 : i32, i32
  }
  func.func @transform_9(%arg0: i32) -> (i32, i32) {
    %c0_i32 = arith.constant 0 : i32
    %c0_i32_0 = arith.constant 0 : i32
    %c0_i32_1 = arith.constant 0 : i32
    return %c0_i32, %c0_i32_0 : i32, i32
  }
  func.func @transform_10(%arg0: i32) -> (i32, i32) {
    %c0_i32 = arith.constant 0 : i32
    %c0_i32_0 = arith.constant 0 : i32
    %c0_i32_1 = arith.constant 0 : i32
    return %c0_i32, %c0_i32_0 : i32, i32
  }
  func.func @transform_11(%arg0: i32) -> (i32, i32) {
    %c0_i32 = arith.constant 0 : i32
    %c0_i32_0 = arith.constant 0 : i32
    return %arg0, %c0_i32 : i32, i32
  }
}

</mosaic_0001>

<llo_original>
// kernel: tpu_custom_call.1
$region0: #{tpu_custom_call.1}
  #allocation0 [shape = 'u32[]', space=smem, size = 0x4, offset = 0x4, fixed_abs, tag = 'smem constant byte address 0x4 - core index']
  #allocation1 [shape = 'u32[144,128]{1,0:T(1,128)}', space=vmem, size = 0x12000, scoped, tag = 'internal scratch']
  %s0 = inlined_call_operand.vmem [shape: bf16[128,256], index: 0, kind: input, shape index: {}]
  %s1 = inlined_call_operand.vmem [shape: s32[128,128], index: 1, kind: input, shape index: {}]
  %s2 = inlined_call_operand.vmem [shape: s32[128,64], index: 2, kind: input, shape index: {}]
  %s3 = inlined_call_operand.hbm [shape: bf16[256,128], index: 3, kind: input, shape index: {}]
  %s4 = inlined_call_operand.vmem [shape: f32[1,128], index: 4, kind: input, shape index: {}]
  %s5 = inlined_call_operand.vmem [shape: bf16[128,64], index: 5, kind: input, shape index: {}]
  %s6 = inlined_call_operand.vmem [shape: f32[1,64], index: 6, kind: input, shape index: {}]
  %s7 = inlined_call_operand.vmem [shape: bf16[64,32], index: 7, kind: input, shape index: {}]
  %s8 = inlined_call_operand.hbm [shape: f32[1,32], index: 8, kind: input, shape index: {}]
  %s9 = inlined_call_operand.vmem [shape: bf16[32,128], index: 9, kind: input, shape index: {}]
  %s10 = inlined_call_operand.vmem [shape: f32[1,128], index: 10, kind: input, shape index: {}]
  %s11 = inlined_call_operand.hbm [shape: f32[128,128], index: 11, kind: output, shape index: {}]
  %s12 = sld [smem:[#allocation0]]
  $region62: #{tpu_custom_call.1} parent=0
    _
  %s14 = ssub.s32 1, %s12
  %s15 = scalar_select 0, %s14, %s12
  $region1: #{tpu_custom_call.1} parent=0
    #allocation2 [shape = 'u8[65536]{0}', space=vmem, size = 0x10000, scoped, tag = 'input window, operand 3, single buffered']
    #allocation3 [shape = 's32[1]{0}', space=sflag, size = 0x4, scoped, tag = 'scoped memory for tpu_custom_call.1']
    #allocation4 [shape = 's32[1]{0}', space=sflag, size = 0x4, scoped, tag = 'scoped memory for tpu_custom_call.1']
    #allocation5 [shape = 'u8[512]{0}', space=vmem, size = 0x400, scoped, tag = 'input window, operand 8, single buffered']
    #allocation6 [shape = 's32[1]{0}', space=sflag, size = 0x4, scoped, tag = 'scoped memory for tpu_custom_call.1']
    #allocation7 [shape = 'u8[65536]{0}', space=vmem, size = 0x10000, scoped, tag = 'output window, operand 0, single buffered']
    %16 = vsyncpa [#allocation3], 0
    %17 = vsyncpa [#allocation6], 0
    %18 = vsyncpa [#allocation4], 0
    // Predicated region
    $region2: #{tpu_custom_call.1} parent=1 // pred_check
      _
    $region3: #{tpu_custom_call.1} parent=1 // pred_check_branch
      %20 = sbr.rel (0) target = $region5
    $region4: #{tpu_custom_call.1} parent=1 // pred_region
      _
    $region5: #{tpu_custom_call.1} parent=1 // pred_fallthru
      _
    // Predicated region
    $region6: #{tpu_custom_call.1} parent=1 // pred_check
      _
    $region7: #{tpu_custom_call.1} parent=1 // pred_check_branch
      %22 = sbr.rel (0) target = $region9
    $region8: #{tpu_custom_call.1} parent=1 // pred_region
      _
    $region9: #{tpu_custom_call.1} parent=1 // pred_fallthru
      _
    // Predicated region
    $region10: #{tpu_custom_call.1} parent=1 // pred_check
      _
    $region11: #{tpu_custom_call.1} parent=1 // pred_check_branch
      %24 = sbr.rel (0) target = $region13
    $region12: #{tpu_custom_call.1} parent=1 // pred_region
      _
    $region13: #{tpu_custom_call.1} parent=1 // pred_fallthru
      _
    // Predicated region
    $region14: #{tpu_custom_call.1} parent=1 // pred_check
      _
    $region15: #{tpu_custom_call.1} parent=1 // pred_check_branch
      %26 = sbr.rel (0) target = $region17
    $region16: #{tpu_custom_call.1} parent=1 // pred_region
      %s28 = ssub.s32 2048, 2048
      %29 = vsyncadd [#allocation3], %s28
      %s30 = sshll.u32 [#allocation2], 4
      %s31 = int_to_ptr.vmem [resolvable:$true] %s30
      %36 = dma.hbm_to_vmem [thread:$0]  %s3, 2048, %s31, [#allocation3], 64, 64, 4
    $region17: #{tpu_custom_call.1} parent=1 // pred_fallthru
      _
    // Predicated region
    $region18: #{tpu_custom_call.1} parent=1 // pred_check
      _
    $region19: #{tpu_custom_call.1} parent=1 // pred_check_branch
      %38 = sbr.rel (0) target = $region21
    $region20: #{tpu_custom_call.1} parent=1 // pred_region
      _
    $region21: #{tpu_custom_call.1} parent=1 // pred_fallthru
      _
    // Predicated region
    $region22: #{tpu_custom_call.1} parent=1 // pred_check
      _
    $region23: #{tpu_custom_call.1} parent=1 // pred_check_branch
      %40 = sbr.rel (0) target = $region25
    $region24: #{tpu_custom_call.1} parent=1 // pred_region
      _
    $region25: #{tpu_custom_call.1} parent=1 // pred_fallthru
      _
    // Predicated region
    $region26: #{tpu_custom_call.1} parent=1 // pred_check
      _
    $region27: #{tpu_custom_call.1} parent=1 // pred_check_branch
      %42 = sbr.rel (0) target = $region29
    $region28: #{tpu_custom_call.1} parent=1 // pred_region
      _
    $region29: #{tpu_custom_call.1} parent=1 // pred_fallthru
      _
    // Predicated region
    $region30: #{tpu_custom_call.1} parent=1 // pred_check
      _
    $region31: #{tpu_custom_call.1} parent=1 // pred_check_branch
      %44 = sbr.rel (0) target = $region33
    $region32: #{tpu_custom_call.1} parent=1 // pred_region
      _
    $region33: #{tpu_custom_call.1} parent=1 // pred_fallthru
      _
    // Predicated region
    $region34: #{tpu_custom_call.1} parent=1 // pred_check
      _
    $region35: #{tpu_custom_call.1} parent=1 // pred_check_branch
      %46 = sbr.rel (0) target = $region37
    $region36: #{tpu_custom_call.1} parent=1 // pred_region
      %s48 = ssub.s32 16, 16
      %49 = vsyncadd [#allocation6], %s48
      %s51 = sshll.u32 [#allocation5], 4
      %s52 = int_to_ptr.vmem [resolvable:$true] %s51
      %54 = dma.hbm_to_vmem [thread:$0]  %s8, 16, %s52, [#allocation6]
    $region37: #{tpu_custom_call.1} parent=1 // pred_fallthru
      _
    // Predicated region
    $region38: #{tpu_custom_call.1} parent=1 // pred_check
      _
    $region39: #{tpu_custom_call.1} parent=1 // pred_check_branch
      %56 = sbr.rel (0) target = $region41
    $region40: #{tpu_custom_call.1} parent=1 // pred_region
      _
    $region41: #{tpu_custom_call.1} parent=1 // pred_fallthru
      _
    // Predicated region
    $region42: #{tpu_custom_call.1} parent=1 // pred_check
      _
    $region43: #{tpu_custom_call.1} parent=1 // pred_check_branch
      %58 = sbr.rel (0) target = $region45
    $region44: #{tpu_custom_call.1} parent=1 // pred_region
      _
    $region45: #{tpu_custom_call.1} parent=1 // pred_fallthru
      _
    // Predicated region
    $region46: #{tpu_custom_call.1} parent=1 // pred_check
      _
    $region47: #{tpu_custom_call.1} parent=1 // pred_check_branch
      %60 = sbr.rel (0) target = $region49
    $region48: #{tpu_custom_call.1} parent=1 // pred_region
      %61 = dma.done [#allocation3], 2048
    $region49: #{tpu_custom_call.1} parent=1 // pred_fallthru
      _
    // Predicated region
    $region50: #{tpu_custom_call.1} parent=1 // pred_check
      _
    $region51: #{tpu_custom_call.1} parent=1 // pred_check_branch
      %63 = sbr.rel (0) target = $region53
    $region52: #{tpu_custom_call.1} parent=1 // pred_region
      %64 = dma.done [#allocation6], 16
    $region53: #{tpu_custom_call.1} parent=1 // pred_fallthru
      _
    %v66 = vld [vmem:[%s0] sm:$0xff]
    %v67 = vld [vmem:[%s0 + $0x8] sm:$0xff]
    %v68 = vld [vmem:[%s0 + $0x10] sm:$0xff]
    %v69 = vld [vmem:[%s0 + $0x18] sm:$0xff]
    %v70 = vld [vmem:[%s0 + $0x20] sm:$0xff]
    %v71 = vld [vmem:[%s0 + $0x28] sm:$0xff]
    %v72 = vld [vmem:[%s0 + $0x30] sm:$0xff]
    %v73 = vld [vmem:[%s0 + $0x38] sm:$0xff]
    %v74 = vld [vmem:[%s0 + $0x40] sm:$0xff]
    %v75 = vld [vmem:[%s0 + $0x48] sm:$0xff]
    %v76 = vld [vmem:[%s0 + $0x50] sm:$0xff]
    %v77 = vld [vmem:[%s0 + $0x58] sm:$0xff]
    %v78 = vld [vmem:[%s0 + $0x60] sm:$0xff]
    %v79 = vld [vmem:[%s0 + $0x68] sm:$0xff]
    %v80 = vld [vmem:[%s0 + $0x70] sm:$0xff]
    %v81 = vld [vmem:[%s0 + $0x78] sm:$0xff]
    %v82 = vld [vmem:[#allocation2] sm:$0xf]
    %v83 = vld [vmem:[#allocation2 + $0x4] sm:$0xf]
    %v84 = vld [vmem:[#allocation2 + $0x8] sm:$0xf]
    %v85 = vld [vmem:[#allocation2 + $0xc] sm:$0xf]
    %v86 = vld [vmem:[#allocation2 + $0x10] sm:$0xf]
    %v87 = vld [vmem:[#allocation2 + $0x14] sm:$0xf]
    %v88 = vld [vmem:[#allocation2 + $0x18] sm:$0xf]
    %v89 = vld [vmem:[#allocation2 + $0x1c] sm:$0xf]
    %v90 = vld [vmem:[#allocation2 + $0x20] sm:$0xf]
    %v91 = vld [vmem:[#allocation2 + $0x24] sm:$0xf]
    %v92 = vld [vmem:[#allocation2 + $0x28] sm:$0xf]
    %v93 = vld [vmem:[#allocation2 + $0x2c] sm:$0xf]
    %v94 = vld [vmem:[#allocation2 + $0x30] sm:$0xf]
    %v95 = vld [vmem:[#allocation2 + $0x34] sm:$0xf]
    %v96 = vld [vmem:[#allocation2 + $0x38] sm:$0xf]
    %v97 = vld [vmem:[#allocation2 + $0x3c] sm:$0xf]
    %v98 = vld [vmem:[#allocation2 + $0x40] sm:$0xf]
    %v99 = vld [vmem:[#allocation2 + $0x44] sm:$0xf]
    %v100 = vld [vmem:[#allocation2 + $0x48] sm:$0xf]
    %v101 = vld [vmem:[#allocation2 + $0x4c] sm:$0xf]
    %v102 = vld [vmem:[#allocation2 + $0x50] sm:$0xf]
    %v103 = vld [vmem:[#allocation2 + $0x54] sm:$0xf]
    %v104 = vld [vmem:[#allocation2 + $0x58] sm:$0xf]
    %v105 = vld [vmem:[#allocation2 + $0x5c] sm:$0xf]
    %v106 = vld [vmem:[#allocation2 + $0x60] sm:$0xf]
    %v107 = vld [vmem:[#allocation2 + $0x64] sm:$0xf]
    %v108 = vld [vmem:[#allocation2 + $0x68] sm:$0xf]
    %v109 = vld [vmem:[#allocation2 + $0x6c] sm:$0xf]
    %v110 = vld [vmem:[#allocation2 + $0x70] sm:$0xf]
    %v111 = vld [vmem:[#allocation2 + $0x74] sm:$0xf]
    %v112 = vld [vmem:[#allocation2 + $0x78] sm:$0xf]
    %v113 = vld [vmem:[#allocation2 + $0x7c] sm:$0xf]
    %v114 = vld [vmem:[%s4] sm:$0x1]
    %v116 = vlaneseq
    %v117 = vshrl.u32 %v116, 7
    %v118 = vsub.s32 0, %v117
    %v119 = vrot.slane %v114, %v118
    %v137 = vunpack.c.l.b16 %v66
    %v138 = vunpack.c.h.b16 %v66
    %v139 = vunpack.c.l.b16 %v67
    %v140 = vunpack.c.h.b16 %v67
    %v141 = vunpack.c.l.b16 %v68
    %v142 = vunpack.c.h.b16 %v68
    %v143 = vunpack.c.l.b16 %v69
    %v144 = vunpack.c.h.b16 %v69
    %v145 = vunpack.c.l.b16 %v70
    %v146 = vunpack.c.h.b16 %v70
    %v147 = vunpack.c.l.b16 %v71
    %v148 = vunpack.c.h.b16 %v71
    %v149 = vunpack.c.l.b16 %v72
    %v150 = vunpack.c.h.b16 %v72
    %v151 = vunpack.c.l.b16 %v73
    %v152 = vunpack.c.h.b16 %v73
    %v153 = vunpack.c.l.b16 %v74
    %v154 = vunpack.c.h.b16 %v74
    %v155 = vunpack.c.l.b16 %v75
    %v156 = vunpack.c.h.b16 %v75
    %v157 = vunpack.c.l.b16 %v76
    %v158 = vunpack.c.h.b16 %v76
    %v159 = vunpack.c.l.b16 %v77
    %v160 = vunpack.c.h.b16 %v77
    %v161 = vunpack.c.l.b16 %v78
    %v162 = vunpack.c.h.b16 %v78
    %v163 = vunpack.c.l.b16 %v79
    %v164 = vunpack.c.h.b16 %v79
    %v165 = vunpack.c.l.b16 %v80
    %v166 = vunpack.c.h.b16 %v80
    %v167 = vunpack.c.l.b16 %v81
    %v168 = vunpack.c.h.b16 %v81
    %v169 = vpack.c.b16 %v139, %v137
    %v170 = vpack.c.b16 %v140, %v138
    %v171 = vpack.c.b16 %v143, %v141
    %v172 = vpack.c.b16 %v144, %v142
    %v173 = vpack.c.b16 %v147, %v145
    %v174 = vpack.c.b16 %v148, %v146
    %v175 = vpack.c.b16 %v151, %v149
    %v176 = vpack.c.b16 %v152, %v150
    %v177 = vpack.c.b16 %v155, %v153
    %v178 = vpack.c.b16 %v156, %v154
    %v179 = vpack.c.b16 %v159, %v157
    %v180 = vpack.c.b16 %v160, %v158
    %v181 = vpack.c.b16 %v163, %v161
    %v182 = vpack.c.b16 %v164, %v162
    %v183 = vpack.c.b16 %v167, %v165
    %v184 = vpack.c.b16 %v168, %v166
    %v233 = vunpack.c.l.b16 %v82
    %v234 = vunpack.c.l.b16 %v83
    %v235 = vunpack.c.l.b16 %v84
    %v236 = vunpack.c.l.b16 %v85
    %v237 = vunpack.c.l.b16 %v86
    %v238 = vunpack.c.l.b16 %v87
    %v239 = vunpack.c.l.b16 %v88
    %v240 = vunpack.c.l.b16 %v89
    %v241 = vunpack.c.l.b16 %v90
    %v242 = vunpack.c.l.b16 %v91
    %v243 = vunpack.c.l.b16 %v92
    %v244 = vunpack.c.l.b16 %v93
    %v245 = vunpack.c.l.b16 %v94
    %v246 = vunpack.c.l.b16 %v95
    %v247 = vunpack.c.l.b16 %v96
    %v248 = vunpack.c.l.b16 %v97
    %v249 = vunpack.c.l.b16 %v98
    %v250 = vunpack.c.l.b16 %v99
    %v251 = vunpack.c.l.b16 %v100
    %v252 = vunpack.c.l.b16 %v101
    %v253 = vunpack.c.l.b16 %v102
    %v254 = vunpack.c.l.b16 %v103
    %v255 = vunpack.c.l.b16 %v104
    %v256 = vunpack.c.l.b16 %v105
    %v257 = vunpack.c.l.b16 %v106
    %v258 = vunpack.c.l.b16 %v107
    %v259 = vunpack.c.l.b16 %v108
    %v260 = vunpack.c.l.b16 %v109
    %v261 = vunpack.c.l.b16 %v110
    %v262 = vunpack.c.l.b16 %v111
    %v263 = vunpack.c.l.b16 %v112
    %v264 = vunpack.c.l.b16 %v113
    %v265 = vpack.c.b16 %v234, %v233
    %v266 = vpack.c.b16 %v236, %v235
    %v267 = vpack.c.b16 %v238, %v237
    %v268 = vpack.c.b16 %v240, %v239
    %v269 = vpack.c.b16 %v242, %v241
    %v270 = vpack.c.b16 %v244, %v243
    %v271 = vpack.c.b16 %v246, %v245
    %v272 = vpack.c.b16 %v248, %v247
    %v273 = vpack.c.b16 %v250, %v249
    %v274 = vpack.c.b16 %v252, %v251
    %v275 = vpack.c.b16 %v254, %v253
    %v276 = vpack.c.b16 %v256, %v255
    %v277 = vpack.c.b16 %v258, %v257
    %v278 = vpack.c.b16 %v260, %v259
    %v279 = vpack.c.b16 %v262, %v261
    %v280 = vpack.c.b16 %v264, %v263
    %297 = vmatprep.subr.bf16.mxu0 0
    %298 = vmatpush1.bf16.msra.mxu0 %v265
    %299 = vmatprep.subr.bf16.mxu0 0
    %300 = vmatpush1.bf16.msra.mxu0 %v266
    %301 = vmatprep.subr.bf16.mxu0 0
    %302 = vmatpush1.bf16.msra.mxu0 %v267
    %303 = vmatprep.subr.bf16.mxu0 0
    %304 = vmatpush1.bf16.msra.mxu0 %v268
    %305 = vmatprep.subr.bf16.mxu0 0
    %306 = vmatpush1.bf16.msra.mxu0 %v269
    %307 = vmatprep.subr.bf16.mxu0 0
    %308 = vmatpush1.bf16.msra.mxu0 %v270
    %309 = vmatprep.subr.bf16.mxu0 0
    %310 = vmatpush1.bf16.msra.mxu0 %v271
    %311 = vmatprep.subr.bf16.mxu0 0
    %312 = vmatpush1.bf16.msra.mxu0 %v272
    %313 = vmatprep.subr.bf16.mxu0 0
    %314 = vmatpush1.bf16.msra.mxu0 %v273
    %315 = vmatprep.subr.bf16.mxu0 0
    %316 = vmatpush1.bf16.msra.mxu0 %v274
    %317 = vmatprep.subr.bf16.mxu0 0
    %318 = vmatpush1.bf16.msra.mxu0 %v275
    %319 = vmatprep.subr.bf16.mxu0 0
    %320 = vmatpush1.bf16.msra.mxu0 %v276
    %321 = vmatprep.subr.bf16.mxu0 0
    %322 = vmatpush1.bf16.msra.mxu0 %v277
    %323 = vmatprep.subr.bf16.mxu0 0
    %324 = vmatpush1.bf16.msra.mxu0 %v278
    %325 = vmatprep.subr.bf16.mxu0 0
    %326 = vmatpush1.bf16.msra.mxu0 %v279
    %327 = vmatprep.subr.bf16.mxu0 0
    %328 = vmatpush1.bf16.msra.mxu0 %v280
    %329 = vmatprep.mubr.bf16.mxu0 %v170
    %330 = vmatmul.mubr.bf16.gmra.mrb[0].mxu0 %v169
    %v331 = vpop.f32.mrb[0].mxu0
    %v332 = vadd.f32 %v119, %v331
    %v333 = vpop.f32.mrb[0].mxu0
    %v334 = vpop.f32.mrb[0].mxu0
    %v335 = vadd.f32 %v119, %v334
    %v336 = vpop.f32.mrb[0].mxu0
    %337 = vmatprep.mubr.bf16.mxu0 %v172
    %338 = vmatmul.mubr.bf16.gmra.mrb[0].mxu0 %v171
    %v339 = vpop.f32.mrb[0].mxu0
    %v340 = vadd.f32 %v119, %v339
    %v341 = vpop.f32.mrb[0].mxu0
    %v342 = vpop.f32.mrb[0].mxu0
    %v343 = vadd.f32 %v119, %v342
    %v344 = vpop.f32.mrb[0].mxu0
    %345 = vmatprep.mubr.bf16.mxu0 %v174
    %346 = vmatmul.mubr.bf16.gmra.mrb[0].mxu0 %v173
    %v347 = vpop.f32.mrb[0].mxu0
    %v348 = vadd.f32 %v119, %v347
    %v349 = vpop.f32.mrb[0].mxu0
    %v350 = vpop.f32.mrb[0].mxu0
    %v351 = vadd.f32 %v119, %v350
    %v352 = vpop.f32.mrb[0].mxu0
    %353 = vmatprep.mubr.bf16.mxu0 %v176
    %354 = vmatmul.mubr.bf16.gmra.mrb[0].mxu0 %v175
    %v355 = vpop.f32.mrb[0].mxu0
    %v356 = vadd.f32 %v119, %v355
    %v357 = vpop.f32.mrb[0].mxu0
    %v358 = vpop.f32.mrb[0].mxu0
    %v359 = vadd.f32 %v119, %v358
    %v360 = vpop.f32.mrb[0].mxu0
    %361 = vmatprep.mubr.bf16.mxu0 %v178
    %362 = vmatmul.mubr.bf16.gmra.mrb[0].mxu0 %v177
    %v363 = vpop.f32.mrb[0].mxu0
    %v364 = vadd.f32 %v119, %v363
    %v365 = vpop.f32.mrb[0].mxu0
    %v366 = vpop.f32.mrb[0].mxu0
    %v367 = vadd.f32 %v119, %v366
    %v368 = vpop.f32.mrb[0].mxu0
    %369 = vmatprep.mubr.bf16.mxu0 %v180
    %370 = vmatmul.mubr.bf16.gmra.mrb[0].mxu0 %v179
    %v371 = vpop.f32.mrb[0].mxu0
    %v372 = vadd.f32 %v119, %v371
    %v373 = vpop.f32.mrb[0].mxu0
    %v374 = vpop.f32.mrb[0].mxu0
    %v375 = vadd.f32 %v119, %v374
    %v376 = vpop.f32.mrb[0].mxu0
    %377 = vmatprep.mubr.bf16.mxu0 %v182
    %378 = vmatmul.mubr.bf16.gmra.mrb[0].mxu0 %v181
    %v379 = vpop.f32.mrb[0].mxu0
    %v380 = vadd.f32 %v119, %v379
    %v381 = vpop.f32.mrb[0].mxu0
    %v382 = vpop.f32.mrb[0].mxu0
    %v383 = vadd.f32 %v119, %v382
    %v384 = vpop.f32.mrb[0].mxu0
    %385 = vmatprep.mubr.bf16.mxu0 %v184
    %386 = vmatmul.mubr.bf16.gmra.mrb[0].mxu0 %v183
    %v387 = vpop.f32.mrb[0].mxu0
    %v388 = vadd.f32 %v119, %v387
    %v389 = vpop.f32.mrb[0].mxu0
    %v390 = vpop.f32.mrb[0].mxu0
    %v391 = vadd.f32 %v119, %v390
    %v392 = vpop.f32.mrb[0].mxu0
    %393 = vdwg.mxu0
    %v394 = vmax.f32 %v332, 0.0
    %v395 = vmax.f32 %v335, 0.0
    %v396 = vmax.f32 %v340, 0.0
    %v397 = vmax.f32 %v343, 0.0
    %v398 = vmax.f32 %v348, 0.0
    %v399 = vmax.f32 %v351, 0.0
    %v400 = vmax.f32 %v356, 0.0
    %v401 = vmax.f32 %v359, 0.0
    %v402 = vmax.f32 %v364, 0.0
    %v403 = vmax.f32 %v367, 0.0
    %v404 = vmax.f32 %v372, 0.0
    %v405 = vmax.f32 %v375, 0.0
    %v406 = vmax.f32 %v380, 0.0
    %v407 = vmax.f32 %v383, 0.0
    %v408 = vmax.f32 %v388, 0.0
    %v409 = vmax.f32 %v391, 0.0
    %v410 = vld [vmem:[%s1] sm:$0xff]
    %v411 = vld [vmem:[%s1 + $0x8] sm:$0xff]
    %v412 = vld [vmem:[%s1 + $0x10] sm:$0xff]
    %v413 = vld [vmem:[%s1 + $0x18] sm:$0xff]
    %v414 = vld [vmem:[%s1 + $0x20] sm:$0xff]
    %v415 = vld [vmem:[%s1 + $0x28] sm:$0xff]
    %v416 = vld [vmem:[%s1 + $0x30] sm:$0xff]
    %v417 = vld [vmem:[%s1 + $0x38] sm:$0xff]
    %v418 = vld [vmem:[%s1 + $0x40] sm:$0xff]
    %v419 = vld [vmem:[%s1 + $0x48] sm:$0xff]
    %v420 = vld [vmem:[%s1 + $0x50] sm:$0xff]
    %v421 = vld [vmem:[%s1 + $0x58] sm:$0xff]
    %v422 = vld [vmem:[%s1 + $0x60] sm:$0xff]
    %v423 = vld [vmem:[%s1 + $0x68] sm:$0xff]
    %v424 = vld [vmem:[%s1 + $0x70] sm:$0xff]
    %v425 = vld [vmem:[%s1 + $0x78] sm:$0xff]
    %vm426 = vcmp.ge.s32.totalorder %v410, 0
    %vm427 = vcmp.ge.s32.totalorder %v411, 0
    %vm428 = vcmp.ge.s32.totalorder %v412, 0
    %vm429 = vcmp.ge.s32.totalorder %v413, 0
    %vm430 = vcmp.ge.s32.totalorder %v414, 0
    %vm431 = vcmp.ge.s32.totalorder %v415, 0
    %vm432 = vcmp.ge.s32.totalorder %v416, 0
    %vm433 = vcmp.ge.s32.totalorder %v417, 0
    %vm434 = vcmp.ge.s32.totalorder %v418, 0
    %vm435 = vcmp.ge.s32.totalorder %v419, 0
    %vm436 = vcmp.ge.s32.totalorder %v420, 0
    %vm437 = vcmp.ge.s32.totalorder %v421, 0
    %vm438 = vcmp.ge.s32.totalorder %v422, 0
    %vm439 = vcmp.ge.s32.totalorder %v423, 0
    %vm440 = vcmp.ge.s32.totalorder %v424, 0
    %vm441 = vcmp.ge.s32.totalorder %v425, 0
    %v442 = vsel %vm426, %v394, 0.0
    %v443 = vsel %vm427, %v395, 0.0
    %v444 = vsel %vm428, %v396, 0.0
    %v445 = vsel %vm429, %v397, 0.0
    %v446 = vsel %vm430, %v398, 0.0
    %v447 = vsel %vm431, %v399, 0.0
    %v448 = vsel %vm432, %v400, 0.0
    %v449 = vsel %vm433, %v401, 0.0
    %v450 = vsel %vm434, %v402, 0.0
    %v451 = vsel %vm435, %v403, 0.0
    %v452 = vsel %vm436, %v404, 0.0
    %v453 = vsel %vm437, %v405, 0.0
    %v454 = vsel %vm438, %v406, 0.0
    %v455 = vsel %vm439, %v407, 0.0
    %v456 = vsel %vm440, %v408, 0.0
    %v457 = vsel %vm441, %v409, 0.0
    %v458 = vpack.c.bf16 %v443, %v442
    %v459 = vpack.c.bf16 %v445, %v444
    %v460 = vpack.c.bf16 %v447, %v446
    %v461 = vpack.c.bf16 %v449, %v448
    %v462 = vpack.c.bf16 %v451, %v450
    %v463 = vpack.c.bf16 %v453, %v452
    %v464 = vpack.c.bf16 %v455, %v454
    %v465 = vpack.c.bf16 %v457, %v456
    %v466 = vld [vmem:[%s5] sm:$0xf]
    %v467 = vld [vmem:[%s5 + $0x4] sm:$0xf]
    %v468 = vld [vmem:[%s5 + $0x8] sm:$0xf]
    %v469 = vld [vmem:[%s5 + $0xc] sm:$0xf]
    %v470 = vld [vmem:[%s5 + $0x10] sm:$0xf]
    %v471 = vld [vmem:[%s5 + $0x14] sm:$0xf]
    %v472 = vld [vmem:[%s5 + $0x18] sm:$0xf]
    %v473 = vld [vmem:[%s5 + $0x1c] sm:$0xf]
    %v474 = vld [vmem:[%s5 + $0x20] sm:$0xf]
    %v475 = vld [vmem:[%s5 + $0x24] sm:$0xf]
    %v476 = vld [vmem:[%s5 + $0x28] sm:$0xf]
    %v477 = vld [vmem:[%s5 + $0x2c] sm:$0xf]
    %v478 = vld [vmem:[%s5 + $0x30] sm:$0xf]
    %v479 = vld [vmem:[%s5 + $0x34] sm:$0xf]
    %v480 = vld [vmem:[%s5 + $0x38] sm:$0xf]
    %v481 = vld [vmem:[%s5 + $0x3c] sm:$0xf]
    %v482 = vld [vmem:[%s6] sm:$0x1]
    %v484 = vlaneseq
    %v485 = vshrl.u32 %v484, 7
    %v486 = vsub.s32 0, %v485
    %v487 = vrot.slane %v482, %v486
    %v505 = vunpack.c.l.b16 %v466
    %v506 = vunpack.c.l.b16 %v467
    %v507 = vunpack.c.l.b16 %v468
    %v508 = vunpack.c.l.b16 %v469
    %v509 = vunpack.c.l.b16 %v470
    %v510 = vunpack.c.l.b16 %v471
    %v511 = vunpack.c.l.b16 %v472
    %v512 = vunpack.c.l.b16 %v473
    %v513 = vunpack.c.l.b16 %v474
    %v514 = vunpack.c.l.b16 %v475
    %v515 = vunpack.c.l.b16 %v476
    %v516 = vunpack.c.l.b16 %v477
    %v517 = vunpack.c.l.b16 %v478
    %v518 = vunpack.c.l.b16 %v479
    %v519 = vunpack.c.l.b16 %v480
    %v520 = vunpack.c.l.b16 %v481
    %v521 = vpack.c.b16 %v506, %v505
    %v522 = vpack.c.b16 %v508, %v507
    %v523 = vpack.c.b16 %v510, %v509
    %v524 = vpack.c.b16 %v512, %v511
    %v525 = vpack.c.b16 %v514, %v513
    %v526 = vpack.c.b16 %v516, %v515
    %v527 = vpack.c.b16 %v518, %v517
    %v528 = vpack.c.b16 %v520, %v519
    %537 = vmatprep.subr.bf16.mxu0 0
    %538 = vmatpush1.bf16.msra.mxu0 %v521
    %539 = vmatprep.subr.bf16.mxu0 0
    %540 = vmatpush1.bf16.msra.mxu0 %v522
    %541 = vmatprep.subr.bf16.mxu0 0
    %542 = vmatpush1.bf16.msra.mxu0 %v523
    %543 = vmatprep.subr.bf16.mxu0 0
    %544 = vmatpush1.bf16.msra.mxu0 %v524
    %545 = vmatprep.subr.bf16.mxu0 0
    %546 = vmatpush1.bf16.msra.mxu0 %v525
    %547 = vmatprep.subr.bf16.mxu0 0
    %548 = vmatpush1.bf16.msra.mxu0 %v526
    %549 = vmatprep.subr.bf16.mxu0 0
    %550 = vmatpush1.bf16.msra.mxu0 %v527
    %551 = vmatprep.subr.bf16.mxu0 0
    %552 = vmatpush1.bf16.msra.mxu0 %v528
    %553 = vmatprep.subr.bf16.mxu0 0
    %554 = vmatpush1.bf16.msra.mxu0 0
    %555 = vmatprep.subr.bf16.mxu0 0
    %556 = vmatpush1.bf16.msra.mxu0 0
    %557 = vmatprep.subr.bf16.mxu0 0
    %558 = vmatpush1.bf16.msra.mxu0 0
    %559 = vmatprep.subr.bf16.mxu0 0
    %560 = vmatpush1.bf16.msra.mxu0 0
    %561 = vmatprep.subr.bf16.mxu0 0
    %562 = vmatpush1.bf16.msra.mxu0 0
    %563 = vmatprep.subr.bf16.mxu0 0
    %564 = vmatpush1.bf16.msra.mxu0 0
    %565 = vmatprep.subr.bf16.mxu0 0
    %566 = vmatpush1.bf16.msra.mxu0 0
    %567 = vmatprep.subr.bf16.mxu0 0
    %568 = vmatpush1.bf16.msra.mxu0 0
    %569 = vmatprep.mubr.bf16.mxu0 0
    %570 = vmatmul.mubr.bf16.gmra.mrb[0].mxu0 %v458
    %v571 = vpop.f32.mrb[0].mxu0
    %v572 = vadd.f32 %v487, %v571
    %v573 = vpop.f32.mrb[0].mxu0
    %v574 = vpop.f32.mrb[0].mxu0
    %v575 = vadd.f32 %v487, %v574
    %v576 = vpop.f32.mrb[0].mxu0
    %577 = vmatprep.mubr.bf16.mxu0 0
    %578 = vmatmul.mubr.bf16.gmra.mrb[0].mxu0 %v459
    %v579 = vpop.f32.mrb[0].mxu0
    %v580 = vadd.f32 %v487, %v579
    %v581 = vpop.f32.mrb[0].mxu0
    %v582 = vpop.f32.mrb[0].mxu0
    %v583 = vadd.f32 %v487, %v582
    %v584 = vpop.f32.mrb[0].mxu0
    %585 = vmatprep.mubr.bf16.mxu0 0
    %586 = vmatmul.mubr.bf16.gmra.mrb[0].mxu0 %v460
    %v587 = vpop.f32.mrb[0].mxu0
    %v588 = vadd.f32 %v487, %v587
    %v589 = vpop.f32.mrb[0].mxu0
    %v590 = vpop.f32.mrb[0].mxu0
    %v591 = vadd.f32 %v487, %v590
    %v592 = vpop.f32.mrb[0].mxu0
    %593 = vmatprep.mubr.bf16.mxu0 0
    %594 = vmatmul.mubr.bf16.gmra.mrb[0].mxu0 %v461
    %v595 = vpop.f32.mrb[0].mxu0
    %v596 = vadd.f32 %v487, %v595
    %v597 = vpop.f32.mrb[0].mxu0
    %v598 = vpop.f32.mrb[0].mxu0
    %v599 = vadd.f32 %v487, %v598
    %v600 = vpop.f32.mrb[0].mxu0
    %601 = vmatprep.mubr.bf16.mxu0 0
    %602 = vmatmul.mubr.bf16.gmra.mrb[0].mxu0 %v462
    %v603 = vpop.f32.mrb[0].mxu0
    %v604 = vadd.f32 %v487, %v603
    %v605 = vpop.f32.mrb[0].mxu0
    %v606 = vpop.f32.mrb[0].mxu0
    %v607 = vadd.f32 %v487, %v606
    %v608 = vpop.f32.mrb[0].mxu0
    %609 = vmatprep.mubr.bf16.mxu0 0
    %610 = vmatmul.mubr.bf16.gmra.mrb[0].mxu0 %v463
    %v611 = vpop.f32.mrb[0].mxu0
    %v612 = vadd.f32 %v487, %v611
    %v613 = vpop.f32.mrb[0].mxu0
    %v614 = vpop.f32.mrb[0].mxu0
    %v615 = vadd.f32 %v487, %v614
    %v616 = vpop.f32.mrb[0].mxu0
    %617 = vmatprep.mubr.bf16.mxu0 0
    %618 = vmatmul.mubr.bf16.gmra.mrb[0].mxu0 %v464
    %v619 = vpop.f32.mrb[0].mxu0
    %v620 = vadd.f32 %v487, %v619
    %v621 = vpop.f32.mrb[0].mxu0
    %v622 = vpop.f32.mrb[0].mxu0
    %v623 = vadd.f32 %v487, %v622
    %v624 = vpop.f32.mrb[0].mxu0
    %625 = vmatprep.mubr.bf16.mxu0 0
    %626 = vmatmul.mubr.bf16.gmra.mrb[0].mxu0 %v465
    %v627 = vpop.f32.mrb[0].mxu0
    %v628 = vadd.f32 %v487, %v627
    %v629 = vpop.f32.mrb[0].mxu0
    %v630 = vpop.f32.mrb[0].mxu0
    %v631 = vadd.f32 %v487, %v630
    %v632 = vpop.f32.mrb[0].mxu0
    %633 = vdwg.mxu0
    %v634 = vmax.f32 %v572, 0.0
    %v635 = vmax.f32 %v575, 0.0
    %v636 = vmax.f32 %v580, 0.0
    %v637 = vmax.f32 %v583, 0.0
    %v638 = vmax.f32 %v588, 0.0
    %v639 = vmax.f32 %v591, 0.0
    %v640 = vmax.f32 %v596, 0.0
    %v641 = vmax.f32 %v599, 0.0
    %v642 = vmax.f32 %v604, 0.0
    %v643 = vmax.f32 %v607, 0.0
    %v644 = vmax.f32 %v612, 0.0
    %v645 = vmax.f32 %v615, 0.0
    %v646 = vmax.f32 %v620, 0.0
    %v647 = vmax.f32 %v623, 0.0
    %v648 = vmax.f32 %v628, 0.0
    %v649 = vmax.f32 %v631, 0.0
    %v650 = vld [vmem:[%s2] sm:$0xff]
    %v651 = vld [vmem:[%s2 + $0x8] sm:$0xff]
    %v652 = vld [vmem:[%s2 + $0x10] sm:$0xff]
    %v653 = vld [vmem:[%s2 + $0x18] sm:$0xff]
    %v654 = vld [vmem:[%s2 + $0x20] sm:$0xff]
    %v655 = vld [vmem:[%s2 + $0x28] sm:$0xff]
    %v656 = vld [vmem:[%s2 + $0x30] sm:$0xff]
    %v657 = vld [vmem:[%s2 + $0x38] sm:$0xff]
    %v658 = vld [vmem:[%s2 + $0x40] sm:$0xff]
    %v659 = vld [vmem:[%s2 + $0x48] sm:$0xff]
    %v660 = vld [vmem:[%s2 + $0x50] sm:$0xff]
    %v661 = vld [vmem:[%s2 + $0x58] sm:$0xff]
    %v662 = vld [vmem:[%s2 + $0x60] sm:$0xff]
    %v663 = vld [vmem:[%s2 + $0x68] sm:$0xff]
    %v664 = vld [vmem:[%s2 + $0x70] sm:$0xff]
    %v665 = vld [vmem:[%s2 + $0x78] sm:$0xff]
    %vm666 = vcmp.ge.s32.totalorder %v650, 0
    %vm667 = vcmp.ge.s32.totalorder %v651, 0
    %vm668 = vcmp.ge.s32.totalorder %v652, 0
    %vm669 = vcmp.ge.s32.totalorder %v653, 0
    %vm670 = vcmp.ge.s32.totalorder %v654, 0
    %vm671 = vcmp.ge.s32.totalorder %v655, 0
    %vm672 = vcmp.ge.s32.totalorder %v656, 0
    %vm673 = vcmp.ge.s32.totalorder %v657, 0
    %vm674 = vcmp.ge.s32.totalorder %v658, 0
    %vm675 = vcmp.ge.s32.totalorder %v659, 0
    %vm676 = vcmp.ge.s32.totalorder %v660, 0
    %vm677 = vcmp.ge.s32.totalorder %v661, 0
    %vm678 = vcmp.ge.s32.totalorder %v662, 0
    %vm679 = vcmp.ge.s32.totalorder %v663, 0
    %vm680 = vcmp.ge.s32.totalorder %v664, 0
    %vm681 = vcmp.ge.s32.totalorder %v665, 0
    %v682 = vsel %vm666, %v634, 0.0
    %v683 = vsel %vm667, %v635, 0.0
    %v684 = vsel %vm668, %v636, 0.0
    %v685 = vsel %vm669, %v637, 0.0
    %v686 = vsel %vm670, %v638, 0.0
    %v687 = vsel %vm671, %v639, 0.0
    %v688 = vsel %vm672, %v640, 0.0
    %v689 = vsel %vm673, %v641, 0.0
    %v690 = vsel %vm674, %v642, 0.0
    %v691 = vsel %vm675, %v643, 0.0
    %v692 = vsel %vm676, %v644, 0.0
    %v693 = vsel %vm677, %v645, 0.0
    %v694 = vsel %vm678, %v646, 0.0
    %v695 = vsel %vm679, %v647, 0.0
    %v696 = vsel %vm680, %v648, 0.0
    %v697 = vsel %vm681, %v649, 0.0
    %v698 = vpack.c.bf16 %v683, %v682
    %v699 = vpack.c.bf16 %v685, %v684
    %v700 = vpack.c.bf16 %v687, %v686
    %v701 = vpack.c.bf16 %v689, %v688
    %v702 = vpack.c.bf16 %v691, %v690
    %v703 = vpack.c.bf16 %v693, %v692
    %v704 = vpack.c.bf16 %v695, %v694
    %v705 = vpack.c.bf16 %v697, %v696
    %v706 = vld [vmem:[%s7] sm:$0xf]
    %v707 = vld [vmem:[%s7 + $0x4] sm:$0xf]
    %v708 = vld [vmem:[%s7 + $0x8] sm:$0xf]
    %v709 = vld [vmem:[%s7 + $0xc] sm:$0xf]
    %v710 = vld [vmem:[%s7 + $0x10] sm:$0xf]
    %v711 = vld [vmem:[%s7 + $0x14] sm:$0xf]
    %v712 = vld [vmem:[%s7 + $0x18] sm:$0xf]
    %v713 = vld [vmem:[%s7 + $0x1c] sm:$0xf]
    %v714 = vld [vmem:[#allocation5] sm:$0x1]
    %v716 = vlaneseq
    %v717 = vshrl.u32 %v716, 7
    %v718 = vsub.s32 0, %v717
    %v719 = vrot.slane %v714, %v718
    %v729 = vunpack.c.l.b16 %v706
    %v730 = vunpack.c.l.b16 %v707
    %v731 = vunpack.c.l.b16 %v708
    %v732 = vunpack.c.l.b16 %v709
    %v733 = vunpack.c.l.b16 %v710
    %v734 = vunpack.c.l.b16 %v711
    %v735 = vunpack.c.l.b16 %v712
    %v736 = vunpack.c.l.b16 %v713
    %v737 = vpack.c.b16 %v730, %v729
    %v738 = vpack.c.b16 %v732, %v731
    %v739 = vpack.c.b16 %v734, %v733
    %v740 = vpack.c.b16 %v736, %v735
    %vm745 = vcmask 523264
    %v747 = vsel %vm745, %v698, 0
    %v750 = vsel %vm745, %v699, 0
    %v753 = vsel %vm745, %v700, 0
    %v756 = vsel %vm745, %v701, 0
    %v759 = vsel %vm745, %v702, 0
    %v762 = vsel %vm745, %v703, 0
    %v765 = vsel %vm745, %v704, 0
    %v768 = vsel %vm745, %v705, 0
    %770 = vmatprep.subr.bf16.mxu0 0
    %771 = vmatpush1.bf16.msra.mxu0 %v737
    %772 = vmatprep.subr.bf16.mxu0 0
    %773 = vmatpush1.bf16.msra.mxu0 %v738
    %774 = vmatprep.subr.bf16.mxu0 0
    %775 = vmatpush1.bf16.msra.mxu0 %v739
    %776 = vmatprep.subr.bf16.mxu0 0
    %777 = vmatpush1.bf16.msra.mxu0 %v740
    %778 = vmatprep.subr.bf16.mxu0 0
    %779 = vmatpush1.bf16.msra.mxu0 0
    %780 = vmatprep.subr.bf16.mxu0 0
    %781 = vmatpush1.bf16.msra.mxu0 0
    %782 = vmatprep.subr.bf16.mxu0 0
    %783 = vmatpush1.bf16.msra.mxu0 0
    %784 = vmatprep.subr.bf16.mxu0 0
    %785 = vmatpush1.bf16.msra.mxu0 0
    %786 = vmatprep.subr.bf16.mxu0 0
    %787 = vmatpush1.bf16.msra.mxu0 0
    %788 = vmatprep.subr.bf16.mxu0 0
    %789 = vmatpush1.bf16.msra.mxu0 0
    %790 = vmatprep.subr.bf16.mxu0 0
    %791 = vmatpush1.bf16.msra.mxu0 0
    %792 = vmatprep.subr.bf16.mxu0 0
    %793 = vmatpush1.bf16.msra.mxu0 0
    %794 = vmatprep.subr.bf16.mxu0 0
    %795 = vmatpush1.bf16.msra.mxu0 0
    %796 = vmatprep.subr.bf16.mxu0 0
    %797 = vmatpush1.bf16.msra.mxu0 0
    %798 = vmatprep.subr.bf16.mxu0 0
    %799 = vmatpush1.bf16.msra.mxu0 0
    %800 = vmatprep.subr.bf16.mxu0 0
    %801 = vmatpush1.bf16.msra.mxu0 0
    %802 = vmatprep.mubr.bf16.mxu0 0
    %803 = vmatmul.mubr.bf16.gmra.mrb[0].mxu0 %v747
    %v804 = vpop.f32.mrb[0].mxu0
    %v805 = vadd.f32 %v719, %v804
    %v806 = vpop.f32.mrb[0].mxu0
    %v807 = vpop.f32.mrb[0].mxu0
    %v808 = vadd.f32 %v719, %v807
    %v809 = vpop.f32.mrb[0].mxu0
    %810 = vmatprep.mubr.bf16.mxu0 0
    %811 = vmatmul.mubr.bf16.gmra.mrb[0].mxu0 %v750
    %v812 = vpop.f32.mrb[0].mxu0
    %v813 = vadd.f32 %v719, %v812
    %v814 = vpop.f32.mrb[0].mxu0
    %v815 = vpop.f32.mrb[0].mxu0
    %v816 = vadd.f32 %v719, %v815
    %v817 = vpop.f32.mrb[0].mxu0
    %818 = vmatprep.mubr.bf16.mxu0 0
    %819 = vmatmul.mubr.bf16.gmra.mrb[0].mxu0 %v753
    %v820 = vpop.f32.mrb[0].mxu0
    %v821 = vadd.f32 %v719, %v820
    %v822 = vpop.f32.mrb[0].mxu0
    %v823 = vpop.f32.mrb[0].mxu0
    %v824 = vadd.f32 %v719, %v823
    %v825 = vpop.f32.mrb[0].mxu0
    %826 = vmatprep.mubr.bf16.mxu0 0
    %827 = vmatmul.mubr.bf16.gmra.mrb[0].mxu0 %v756
    %v828 = vpop.f32.mrb[0].mxu0
    %v829 = vadd.f32 %v719, %v828
    %v830 = vpop.f32.mrb[0].mxu0
    %v831 = vpop.f32.mrb[0].mxu0
    %v832 = vadd.f32 %v719, %v831
    %v833 = vpop.f32.mrb[0].mxu0
    %834 = vmatprep.mubr.bf16.mxu0 0
    %835 = vmatmul.mubr.bf16.gmra.mrb[0].mxu0 %v759
    %v836 = vpop.f32.mrb[0].mxu0
    %v837 = vadd.f32 %v719, %v836
    %v838 = vpop.f32.mrb[0].mxu0
    %v839 = vpop.f32.mrb[0].mxu0
    %v840 = vadd.f32 %v719, %v839
    %v841 = vpop.f32.mrb[0].mxu0
    %842 = vmatprep.mubr.bf16.mxu0 0
    %843 = vmatmul.mubr.bf16.gmra.mrb[0].mxu0 %v762
    %v844 = vpop.f32.mrb[0].mxu0
    %v845 = vadd.f32 %v719, %v844
    %v846 = vpop.f32.mrb[0].mxu0
    %v847 = vpop.f32.mrb[0].mxu0
    %v848 = vadd.f32 %v719, %v847
    %v849 = vpop.f32.mrb[0].mxu0
    %850 = vmatprep.mubr.bf16.mxu0 0
    %851 = vmatmul.mubr.bf16.gmra.mrb[0].mxu0 %v765
    %v852 = vpop.f32.mrb[0].mxu0
    %v853 = vadd.f32 %v719, %v852
    %v854 = vpop.f32.mrb[0].mxu0
    %v855 = vpop.f32.mrb[0].mxu0
    %v856 = vadd.f32 %v719, %v855
    %v857 = vpop.f32.mrb[0].mxu0
    %858 = vmatprep.mubr.bf16.mxu0 0
    %859 = vmatmul.mubr.bf16.gmra.mrb[0].mxu0 %v768
    %v860 = vpop.f32.mrb[0].mxu0
    %v861 = vadd.f32 %v719, %v860
    %v862 = vpop.f32.mrb[0].mxu0
    %v863 = vpop.f32.mrb[0].mxu0
    %v864 = vadd.f32 %v719, %v863
    %v865 = vpop.f32.mrb[0].mxu0
    %866 = vdwg.mxu0
    %v867 = vmax.f32 %v805, 0.0
    %v868 = vmax.f32 %v808, 0.0
    %v869 = vmax.f32 %v813, 0.0
    %v870 = vmax.f32 %v816, 0.0
    %v871 = vmax.f32 %v821, 0.0
    %v872 = vmax.f32 %v824, 0.0
    %v873 = vmax.f32 %v829, 0.0
    %v874 = vmax.f32 %v832, 0.0
    %v875 = vmax.f32 %v837, 0.0
    %v876 = vmax.f32 %v840, 0.0
    %v877 = vmax.f32 %v845, 0.0
    %v878 = vmax.f32 %v848, 0.0
    %v879 = vmax.f32 %v853, 0.0
    %v880 = vmax.f32 %v856, 0.0
    %v881 = vmax.f32 %v861, 0.0
    %v882 = vmax.f32 %v864, 0.0
    %v883 = vpack.c.bf16 %v868, %v867
    %v884 = vpack.c.bf16 %v870, %v869
    %v885 = vpack.c.bf16 %v872, %v871
    %v886 = vpack.c.bf16 %v874, %v873
    %v887 = vpack.c.bf16 %v876, %v875
    %v888 = vpack.c.bf16 %v878, %v877
    %v889 = vpack.c.bf16 %v880, %v879
    %v890 = vpack.c.bf16 %v882, %v881
    %v891 = vld [vmem:[%s9] sm:$0xf]
    %v892 = vld [vmem:[%s9 + $0x4] sm:$0xf]
    %v893 = vld [vmem:[%s9 + $0x8] sm:$0xf]
    %v894 = vld [vmem:[%s9 + $0xc] sm:$0xf]
    %v895 = vld [vmem:[%s10] sm:$0x1]
    %v897 = vlaneseq
    %v898 = vshrl.u32 %v897, 7
    %v899 = vsub.s32 0, %v898
    %v900 = vrot.slane %v895, %v899
    %v906 = vunpack.c.l.b16 %v891
    %v907 = vunpack.c.l.b16 %v892
    %v908 = vunpack.c.l.b16 %v893
    %v909 = vunpack.c.l.b16 %v894
    %v910 = vpack.c.b16 %v907, %v906
    %v911 = vpack.c.b16 %v909, %v908
    %vm914 = vcmask 261120
    %v916 = vsel %vm914, %v883, 0
    %v919 = vsel %vm914, %v884, 0
    %v922 = vsel %vm914, %v885, 0
    %v925 = vsel %vm914, %v886, 0
    %v928 = vsel %vm914, %v887, 0
    %v931 = vsel %vm914, %v888, 0
    %v934 = vsel %vm914, %v889, 0
    %v937 = vsel %vm914, %v890, 0
    %939 = vmatprep.subr.bf16.mxu0 0
    %940 = vmatpush1.bf16.msra.mxu0 %v910
    %941 = vmatprep.subr.bf16.mxu0 0
    %942 = vmatpush1.bf16.msra.mxu0 %v911
    %943 = vmatprep.subr.bf16.mxu0 0
    %944 = vmatpush1.bf16.msra.mxu0 0
    %945 = vmatprep.subr.bf16.mxu0 0
    %946 = vmatpush1.bf16.msra.mxu0 0
    %947 = vmatprep.subr.bf16.mxu0 0
    %948 = vmatpush1.bf16.msra.mxu0 0
    %949 = vmatprep.subr.bf16.mxu0 0
    %950 = vmatpush1.bf16.msra.mxu0 0
    %951 = vmatprep.subr.bf16.mxu0 0
    %952 = vmatpush1.bf16.msra.mxu0 0
    %953 = vmatprep.subr.bf16.mxu0 0
    %954 = vmatpush1.bf16.msra.mxu0 0
    %955 = vmatprep.subr.bf16.mxu0 0
    %956 = vmatpush1.bf16.msra.mxu0 0
    %957 = vmatprep.subr.bf16.mxu0 0
    %958 = vmatpush1.bf16.msra.mxu0 0
    %959 = vmatprep.subr.bf16.mxu0 0
    %960 = vmatpush1.bf16.msra.mxu0 0
    %961 = vmatprep.subr.bf16.mxu0 0
    %962 = vmatpush1.bf16.msra.mxu0 0
    %963 = vmatprep.subr.bf16.mxu0 0
    %964 = vmatpush1.bf16.msra.mxu0 0
    %965 = vmatprep.subr.bf16.mxu0 0
    %966 = vmatpush1.bf16.msra.mxu0 0
    %967 = vmatprep.subr.bf16.mxu0 0
    %968 = vmatpush1.bf16.msra.mxu0 0
    %969 = vmatprep.subr.bf16.mxu0 0
    %970 = vmatpush1.bf16.msra.mxu0 0
    %971 = vmatprep.mubr.bf16.mxu0 0
    %972 = vmatmul.mubr.bf16.gmra.mrb[0].mxu0 %v916
    %v973 = vpop.f32.mrb[0].mxu0
    %v974 = vadd.f32 %v900, %v973
    %v975 = vpop.f32.mrb[0].mxu0
    %v976 = vpop.f32.mrb[0].mxu0
    %v977 = vadd.f32 %v900, %v976
    %v978 = vpop.f32.mrb[0].mxu0
    %979 = vmatprep.mubr.bf16.mxu0 0
    %980 = vmatmul.mubr.bf16.gmra.mrb[0].mxu0 %v919
    %v981 = vpop.f32.mrb[0].mxu0
    %v982 = vadd.f32 %v900, %v981
    %v983 = vpop.f32.mrb[0].mxu0
    %v984 = vpop.f32.mrb[0].mxu0
    %v985 = vadd.f32 %v900, %v984
    %v986 = vpop.f32.mrb[0].mxu0
    %987 = vmatprep.mubr.bf16.mxu0 0
    %988 = vmatmul.mubr.bf16.gmra.mrb[0].mxu0 %v922
    %v989 = vpop.f32.mrb[0].mxu0
    %v990 = vadd.f32 %v900, %v989
    %v991 = vpop.f32.mrb[0].mxu0
    %v992 = vpop.f32.mrb[0].mxu0
    %v993 = vadd.f32 %v900, %v992
    %v994 = vpop.f32.mrb[0].mxu0
    %995 = vmatprep.mubr.bf16.mxu0 0
    %996 = vmatmul.mubr.bf16.gmra.mrb[0].mxu0 %v925
    %v997 = vpop.f32.mrb[0].mxu0
    %v998 = vadd.f32 %v900, %v997
    %v999 = vpop.f32.mrb[0].mxu0
    %v1000 = vpop.f32.mrb[0].mxu0
    %v1001 = vadd.f32 %v900, %v1000
    %v1002 = vpop.f32.mrb[0].mxu0
    %1003 = vmatprep.mubr.bf16.mxu0 0
    %1004 = vmatmul.mubr.bf16.gmra.mrb[0].mxu0 %v928
    %v1005 = vpop.f32.mrb[0].mxu0
    %v1006 = vadd.f32 %v900, %v1005
    %v1007 = vpop.f32.mrb[0].mxu0
    %v1008 = vpop.f32.mrb[0].mxu0
    %v1009 = vadd.f32 %v900, %v1008
    %v1010 = vpop.f32.mrb[0].mxu0
    %1011 = vmatprep.mubr.bf16.mxu0 0
    %1012 = vmatmul.mubr.bf16.gmra.mrb[0].mxu0 %v931
    %v1013 = vpop.f32.mrb[0].mxu0
    %v1014 = vadd.f32 %v900, %v1013
    %v1015 = vpop.f32.mrb[0].mxu0
    %v1016 = vpop.f32.mrb[0].mxu0
    %v1017 = vadd.f32 %v900, %v1016
    %v1018 = vpop.f32.mrb[0].mxu0
    %1019 = vmatprep.mubr.bf16.mxu0 0
    %1020 = vmatmul.mubr.bf16.gmra.mrb[0].mxu0 %v934
    %v1021 = vpop.f32.mrb[0].mxu0
    %v1022 = vadd.f32 %v900, %v1021
    %v1023 = vpop.f32.mrb[0].mxu0
    %v1024 = vpop.f32.mrb[0].mxu0
    %v1025 = vadd.f32 %v900, %v1024
    %v1026 = vpop.f32.mrb[0].mxu0
    %1027 = vmatprep.mubr.bf16.mxu0 0
    %1028 = vmatmul.mubr.bf16.gmra.mrb[0].mxu0 %v937
    %v1029 = vpop.f32.mrb[0].mxu0
    %v1030 = vadd.f32 %v900, %v1029
    %v1031 = vpop.f32.mrb[0].mxu0
    %v1032 = vpop.f32.mrb[0].mxu0
    %v1033 = vadd.f32 %v900, %v1032
    %v1034 = vpop.f32.mrb[0].mxu0
    %1035 = vdwg.mxu0
    %1036 = vst [vmem:[#allocation7] sm:$0xff] %v974
    %1037 = vst [vmem:[#allocation7 + $0x8] sm:$0xff] %v977
    %1038 = vst [vmem:[#allocation7 + $0x10] sm:$0xff] %v982
    %1039 = vst [vmem:[#allocation7 + $0x18] sm:$0xff] %v985
    %1040 = vst [vmem:[#allocation7 + $0x20] sm:$0xff] %v990
    %1041 = vst [vmem:[#allocation7 + $0x28] sm:$0xff] %v993
    %1042 = vst [vmem:[#allocation7 + $0x30] sm:$0xff] %v998
    %1043 = vst [vmem:[#allocation7 + $0x38] sm:$0xff] %v1001
    %1044 = vst [vmem:[#allocation7 + $0x40] sm:$0xff] %v1006
    %1045 = vst [vmem:[#allocation7 + $0x48] sm:$0xff] %v1009
    %1046 = vst [vmem:[#allocation7 + $0x50] sm:$0xff] %v1014
    %1047 = vst [vmem:[#allocation7 + $0x58] sm:$0xff] %v1017
    %1048 = vst [vmem:[#allocation7 + $0x60] sm:$0xff] %v1022
    %1049 = vst [vmem:[#allocation7 + $0x68] sm:$0xff] %v1025
    %1050 = vst [vmem:[#allocation7 + $0x70] sm:$0xff] %v1030
    %1051 = vst [vmem:[#allocation7 + $0x78] sm:$0xff] %v1033
    // Predicated region
    $region54: #{tpu_custom_call.1} parent=1 // pred_check
      _
    $region55: #{tpu_custom_call.1} parent=1 // pred_check_branch
      %1053 = sbr.rel (0) target = $region57
    $region56: #{tpu_custom_call.1} parent=1 // pred_region
      %s1055 = ssub.s32 2048, 2048
      %1056 = vsyncadd [#allocation4], %s1055
      %s1057 = sshll.u32 [#allocation7], 4
      %s1058 = int_to_ptr.vmem [resolvable:$true] %s1057
      %1063 = dma.vmem_to_hbm [thread:$0]  %s1058, 2048, %s11, [#allocation4], 128, 128, 8
    $region57: #{tpu_custom_call.1} parent=1 // pred_fallthru
      _
    // Predicated region
    $region58: #{tpu_custom_call.1} parent=1 // pred_check
      _
    $region59: #{tpu_custom_call.1} parent=1 // pred_check_branch
      %1065 = sbr.rel (0) target = $region61
    $region60: #{tpu_custom_call.1} parent=1 // pred_region
      %1066 = dma.done [#allocation4], 2048
    $region61: #{tpu_custom_call.1} parent=1 // pred_fallthru
      _
    %1067 = vsyncpa [#allocation3], 1
    %1068 = vsyncpa [#allocation6], 1
    %1069 = vsyncpa [#allocation4], 1

</llo_original>
